<compile_context>
chip_gen: v5e
topology: v5e:2x2
jax: 0.10.0
libtpu: 0.0.40
codegen_flags: <defaults>
</compile_context>

<pallas_src>
import math
import functools

import jax
import jax.numpy as jnp
from jax.experimental import pallas as pl
from jax.experimental.pallas import tpu as pltpu


def _round_up(v: int, m: int) -> int:
    return ((v + m - 1) // m) * m


def _sinusoidal_kernel(tab_ref, x_ref, out_ref, *, half, dim, exact_cos):
    # tab_ref: (2, dim) f32  [row 0 = freq, row 1 = phase]
    # x_ref:   (TB, 1) f32
    # out_ref: (TB, dim) out_dtype
    x = x_ref[...]                                    # (TB, 1)
    tab = tab_ref[...]                                # (2, dim)
    if not exact_cos:
        # Fused path: one transcendental pass, one dense lane-aligned store.
        freq = tab[0:1, :]                            # (1, dim)
        phase = tab[1:2, :]                           # (1, dim)
        out_ref[...] = jnp.sin(x * freq + phase).astype(out_ref.dtype)
    else:
        # Bit-exact fallback (matches torch sin/cos exactly; cos store is at
        # lane offset `half`, so it is slower when half % 128 != 0).
        freq = tab[0:1, :half]                        # (1, half)
        arg = x * freq                                # (TB, half)
        out_ref[:, :half] = jnp.sin(arg).astype(out_ref.dtype)
        out_ref[:, half:2 * half] = jnp.cos(arg).astype(out_ref.dtype)
        if dim % 2 == 1:
            out_ref[:, 2 * half:] = jnp.zeros((x.shape[0], 1), out_ref.dtype)


def sinusoidal_pos_emb(x: jax.Array, dim: int, *, out_dtype=jnp.float32,
                       exact_cos: bool = False,
                       target_tile_bytes: int = 2 * 1024 * 1024,
                       max_block_b: int = 2048) -> jax.Array:
    """Pallas implementation of SinusoidalPosEmb.forward.

    x: (B,) float array.  Returns (B, dim) in `out_dtype`.

    NOTE: for tiny B (hundreds or less) a standalone pallas_call is dominated
    by launch/DMA fixed cost; in production this should be fused into the
    consumer (first time-MLP matmul).  Kept standalone here per the spec.
    """
    assert x.ndim == 1
    half = dim // 2
    assert half >= 2, "dim must be >= 4 (half==1 divides by zero in emb_scale)"
    b = x.shape[0]
    emb_scale = math.log(10000.0) / (half - 1)

    itemsize = jnp.dtype(out_dtype).itemsize
    # Minimum sublane multiple for the output dtype: f32 -> 8, bf16 -> 16, 8-bit -> 32.
    mult = max(8, 32 // itemsize)

    # ---- dim-aware tile sizing (target ~2 MiB of output per grid step) ----
    tb = _round_up(max(target_tile_bytes // max(dim * itemsize, 1), 1), mult)
    tb = min(tb, _round_up(max_block_b, mult))       # cap row count (input is (TB,1))
    tb = min(tb, _round_up(b, mult))                  # never bigger than needed
    if b > mult:
        # Keep >= 2 grid steps along the "parallel" axis so v7x megacore can split B.
        tb = min(tb, _round_up(pl.cdiv(b, 2), mult))
    tb = max(tb, mult)
    grid = (pl.cdiv(b, tb),)                          # partial last block is clipped by Pallas

    # ---- freq / phase tables, shape (2, dim), built once (constant under jit) ----
    j = jnp.arange(dim, dtype=jnp.int32)
    k = jnp.where(j < half, j, j - half).astype(jnp.float32)
    freq = jnp.where(j < 2 * half,
                     jnp.exp(jnp.float32(-emb_scale) * k),
                     jnp.float32(0.0)).astype(jnp.float32)
    phase = jnp.where((j >= half) & (j < 2 * half),
                      jnp.float32(math.pi / 2.0), jnp.float32(0.0))
    table = jnp.stack([freq, phase], axis=0)          # (2, dim) f32

    x2d = x.astype(jnp.float32).reshape(b, 1)         # free reshape, no padding/copy

    kernel = functools.partial(_sinusoidal_kernel, half=half, dim=dim,
                               exact_cos=exact_cos)

    out = pl.pallas_call(
        kernel,
        out_shape=jax.ShapeDtypeStruct((b, dim), out_dtype),
        grid=grid,
        in_specs=[
            # Constant block: fetched once per core, re-DMA elided across steps.
            pl.BlockSpec((2, dim), lambda i: (0, 0)),
            pl.BlockSpec((tb, 1), lambda i: (i, 0)),
        ],
        out_specs=pl.BlockSpec((tb, dim), lambda i: (i, 0)),
        compiler_params=pltpu.CompilerParams(
            # No reduction axis -> parallel, so v7x megacore can split the B grid.
            dimension_semantics=("parallel",),
        ),
    )(table, x2d)

    return out


def _reference(x: jax.Array, dim: int) -> jax.Array:
    half = dim // 2
    emb = math.log(10000.0) / (half - 1)
    emb = jnp.exp(jnp.arange(half, dtype=jnp.float32) * -emb)
    emb = x.astype(jnp.float32)[:, None] * emb[None, :]
    emb = jnp.concatenate([jnp.sin(emb), jnp.cos(emb)], axis=-1)
    if dim % 2 == 1:
        emb = jnp.pad(emb, ((0, 0), (0, 1)))
    return emb


if __name__ == "__main__":
    key = jax.random.PRNGKey(0)
    batch = 8
    dim = 32
    # x plays the role of "sigma" / timestep values
    x = jax.random.uniform(key, (batch,), dtype=jnp.float32) * 100.0
    ref = _reference(x, dim)

    # Fused single-store path (default).  cos via sin(t+pi/2) adds <= |t|*2^-24
    # argument rounding (~6e-6 at |t|~100), so compare at 2e-5.
    out = jax.block_until_ready(sinusoidal_pos_emb(x, dim))
    assert out.shape == (batch, dim), out.shape
    assert jnp.allclose(out, ref, atol=2e-5, rtol=1e-5), "fused path mismatch"

    # Bit-exact fallback path.
    out_e = jax.block_until_ready(sinusoidal_pos_emb(x, dim, exact_cos=True))
    assert jnp.allclose(out_e, ref, atol=1e-5, rtol=1e-5), "exact path mismatch"

    # Odd dim (trailing zero column) + B not a multiple of the tile (partial block).
    x2 = jax.random.uniform(jax.random.PRNGKey(1), (13,), dtype=jnp.float32) * 50.0
    ref2 = _reference(x2, 33)
    out2 = jax.block_until_ready(sinusoidal_pos_emb(x2, 33))
    assert out2.shape == (13, 33), out2.shape
    assert jnp.allclose(out2, ref2, atol=2e-5, rtol=1e-5), "odd-dim mismatch"
    assert jnp.all(out2[:, -1] == 0), "odd-dim pad column must be zero"

    # bf16 output path (exercises the 16-row sublane multiple).
    out3 = jax.block_until_ready(sinusoidal_pos_emb(x2, 32, out_dtype=jnp.bfloat16))
    ref3 = _reference(x2, 32)
    assert out3.dtype == jnp.bfloat16 and out3.shape == (13, 32)
    assert jnp.allclose(out3.astype(jnp.float32), ref3, atol=2e-2), "bf16 mismatch"

    print("KERNEL_OK")
</pallas_src>

<mosaic_0001>
module attributes {stable_mosaic.version = 11 : i64} {
  func.func @_sinusoidal_kernel(%arg0: i32, %arg1: memref<2x32xf32, #tpu.memory_space<vmem>>, %arg2: memref<8x1xf32, #tpu.memory_space<vmem>>, %arg3: memref<8x32xf32, #tpu.memory_space<vmem>>) attributes {dimension_semantics = [#tpu.dimension_semantics<parallel>], iteration_bounds = array<i64: 1>, scalar_prefetch = 0 : i64, scratch_operands = 0 : i64, tpu.core_type = #tpu.core_type<tc>, window_params = [{pipeline_mode = #tpu.pipeline_mode<synchronous>, transform_indices = @transform_0, window_bounds = array<i64: 2, 32>}, {transform_indices = @transform_1, window_bounds = array<i64: 8, 1>}, {transform_indices = @transform_2, window_bounds = array<i64: 8, 32>}]} {
    %c0 = arith.constant 0 : index
    %c0_0 = arith.constant 0 : index
    %0 = vector.load %arg2[%c0, %c0_0] : memref<8x1xf32, #tpu.memory_space<vmem>>, vector<8x1xf32>
    %c0_1 = arith.constant 0 : index
    %c0_2 = arith.constant 0 : index
    %1 = vector.load %arg1[%c0_1, %c0_2] : memref<2x32xf32, #tpu.memory_space<vmem>>, vector<2x32xf32>
    %2 = vector.extract_strided_slice %1 {offsets = [0, 0], sizes = [1, 32], strides = [1, 1]} : vector<2x32xf32> to vector<1x32xf32>
    %3 = vector.extract_strided_slice %1 {offsets = [1, 0], sizes = [1, 32], strides = [1, 1]} : vector<2x32xf32> to vector<1x32xf32>
    %4 = vector.broadcast %0 : vector<8x1xf32> to vector<8x32xf32>
    %5 = vector.broadcast %2 : vector<1x32xf32> to vector<8x32xf32>
    %6 = arith.mulf %4, %5 : vector<8x32xf32>
    %7 = vector.broadcast %3 : vector<1x32xf32> to vector<8x32xf32>
    %8 = arith.addf %6, %7 : vector<8x32xf32>
    %9 = math.sin %8 : vector<8x32xf32>
    %c0_3 = arith.constant 0 : index
    %c0_4 = arith.constant 0 : index
    %10 = vector.load %arg3[%c0_3, %c0_4] : memref<8x32xf32, #tpu.memory_space<vmem>>, vector<8x32xf32>
    tpu.vector_store %arg3[%c0_3, %c0_4], %9 {strides = array<i32>} : memref<8x32xf32, #tpu.memory_space<vmem>>, vector<8x32xf32>,
    return
  }
  func.func @transform_0(%arg0: i32) -> (i32, i32) {
    %c0_i32 = arith.constant 0 : i32
    %c0_i32_0 = arith.constant 0 : i32
    %c0_i32_1 = arith.constant 0 : i32
    return %c0_i32, %c0_i32_0 : i32, i32
  }
  func.func @transform_1(%arg0: i32) -> (i32, i32) {
    %c0_i32 = arith.constant 0 : i32
    %c0_i32_0 = arith.constant 0 : i32
    return %arg0, %c0_i32 : i32, i32
  }
  func.func @transform_2(%arg0: i32) -> (i32, i32) {
    %c0_i32 = arith.constant 0 : i32
    %c0_i32_0 = arith.constant 0 : i32
    return %arg0, %c0_i32 : i32, i32
  }
}

</mosaic_0001>

<llo_original>
// kernel: tpu_custom_call.1
$region0: #{tpu_custom_call.1}
  #allocation0 [shape = 'u32[]', space=smem, size = 0x4, offset = 0x4, fixed_abs, tag = 'smem constant byte address 0x4 - core index']
  #allocation1 [shape = 'u32[72,128]{1,0:T(1,128)}', space=vmem, size = 0x9000, scoped, tag = 'internal scratch']
  %s0 = inlined_call_operand.vmem [shape: f32[2,32], index: 0, kind: input, shape index: {}]
  %s1 = inlined_call_operand.vmem [shape: f32[8,1], index: 1, kind: input, shape index: {}]
  %s2 = inlined_call_operand.hbm [shape: f32[8,32], index: 2, kind: output, shape index: {}]
  %s3 = sld [smem:[#allocation0]]
  $region18: #{tpu_custom_call.1} parent=0
    _
  %s5 = ssub.s32 1, %s3
  %s6 = scalar_select 0, %s5, %s3
  $region1: #{tpu_custom_call.1} parent=0
    #allocation2 [shape = 'u8[4096]{0}', space=vmem, size = 0x1000, scoped, tag = 'output window, operand 0, single buffered']
    #allocation3 [shape = 's32[1]{0}', space=sflag, size = 0x4, scoped, tag = 'scoped memory for tpu_custom_call.1']
    %7 = vsyncpa [#allocation3], 0
    // Predicated region
    $region2: #{tpu_custom_call.1} parent=1 // pred_check
      _
    $region3: #{tpu_custom_call.1} parent=1 // pred_check_branch
      %9 = sbr.rel (0) target = $region5
    $region4: #{tpu_custom_call.1} parent=1 // pred_region
      _
    $region5: #{tpu_custom_call.1} parent=1 // pred_fallthru
      _
    // Predicated region
    $region6: #{tpu_custom_call.1} parent=1 // pred_check
      _
    $region7: #{tpu_custom_call.1} parent=1 // pred_check_branch
      %11 = sbr.rel (0) target = $region9
    $region8: #{tpu_custom_call.1} parent=1 // pred_region
      _
    $region9: #{tpu_custom_call.1} parent=1 // pred_fallthru
      _
    %v12 = vld [vmem:[%s1] sm:$0xff]
    %v13 = vld [vmem:[%s0] sm:$0x3]
    %15 = vset.pattern.permute.xlu0 0
    %16 = vperm.xlu0 %15, %v12
    %v17 = vpop.permute.xlu0 %16
    %v19 = vperm.slane %v13, 0
    %v20 = vmul.f32 %v17, %v19
    %v21 = vperm.slane %v13, 1
    %v22 = vadd.f32 %v20, %v21
    %v23 = vand.u32 2147483647, %v22
    %vm24 = vcmp.le.f32.partialorder %v23, 0.7853982
    %vm25 = vcmp.lt.s32.totalorder %v22, 0
    %v26 = vand.u32 %v22, 2139095040
    %v27 = vshrl.u32 %v26, 23
    %v28 = vsub.s32 %v27, 127
    %v29 = vand.u32 2147483647, %v22
    %v30 = vand.u32 %v29, 8388607
    %v31 = vor.u32 %v30, 8388608
    %v32 = vsub.s32 0, %v31
    %v33 = vadd.s32 %v28, 1
    %vm34 = vcmp.gt.s32.totalorder %v33, 0
    %v35 = vsel %vm34, %v33, 0
    %v36 = vshrl.u32 %v35, 5
    %v37 = vand.u32 %v35, 31
    %v38 = vsub.s32 32, %v37
    %v39 = vshrl.u32 683565275, %v38
    %v40 = vshll.u32 683565275, %v37
    %v41 = vshrl.u32 2475754826, %v38
    %v42 = vor.u32 %v40, %v41
    %v43 = vshll.u32 2475754826, %v37
    %v44 = vshrl.u32 2131351028, %v38
    %v45 = vor.u32 %v43, %v44
    %v46 = vshll.u32 2131351028, %v37
    %v47 = vshrl.u32 2102212464, %v38
    %v48 = vor.u32 %v46, %v47
    %v49 = vshll.u32 2102212464, %v37
    %v50 = vshrl.u32 920167782, %v38
    %v51 = vor.u32 %v49, %v50
    %v52 = vshll.u32 920167782, %v37
    %v53 = vshrl.u32 1326507024, %v38
    %v54 = vor.u32 %v52, %v53
    %vm55 = vcmp.lt.s32.totalorder %v36, 1
    %vm56 = vcmp.lt.s32.totalorder %v36, 2
    %vm57 = vcmp.lt.s32.totalorder %v36, 3
    %vm58 = vcmp.lt.s32.totalorder %v36, 4
    %v59 = vsel %vm55, %v39, %v42
    %v60 = vsel %vm58, %v48, 2102212464
    %v61 = vsel %vm57, %v45, %v60
    %v62 = vsel %vm56, %v59, %v61
    %v63 = vsel %vm55, %v42, %v45
    %v64 = vsel %vm58, %v51, 920167782
    %v65 = vsel %vm57, %v48, %v64
    %v66 = vsel %vm56, %v63, %v65
    %v67 = vsel %vm55, %v45, %v48
    %v68 = vsel %vm58, %v54, 1326507024
    %v69 = vsel %vm57, %v51, %v68
    %v70 = vsel %vm56, %v67, %v69
    %v71 = vshll.u32 %v31, 8
    %v72 = vand.u32 %v71, 65535
    %v73 = vshrl.u32 %v71, 16
    %v74 = vand.u32 %v70, 65535
    %v75 = vshrl.u32 %v70, 16
    %v76 = vmul.u32 %v72, %v74
    %v77 = vmul.u32 %v72, %v75
    %v78 = vmul.u32 %v73, %v74
    %v79 = vmul.u32 %v73, %v75
    %v80 = vshll.u32 %v77, 16
    %v81 = vshrl.u32 %v77, 16
    %v82 = vshll.u32 %v78, 16
    %v83 = vshrl.u32 %v78, 16
    %vm84 = vc.u32 %v76, %v80
    %v85 = vsel %vm84, 1, 0
    %v86 = vadd.s32 %v76, %v80
    %v87 = vadd.s32 %v79, %v85
    %vm88 = vc.u32 %v86, %v82
    %v89 = vsel %vm88, 1, 0
    %v90 = vadd.s32 %v86, %v82
    %v91 = vadd.s32 %v87, %v89
    %v92 = vadd.s32 %v91, %v81
    %v93 = vadd.s32 %v92, %v83
    %v94 = vand.u32 %v71, 65535
    %v95 = vshrl.u32 %v71, 16
    %v96 = vand.u32 %v66, 65535
    %v97 = vshrl.u32 %v66, 16
    %v98 = vmul.u32 %v94, %v96
    %v99 = vmul.u32 %v94, %v97
    %v100 = vmul.u32 %v95, %v96
    %v101 = vmul.u32 %v95, %v97
    %v102 = vshll.u32 %v99, 16
    %v103 = vshrl.u32 %v99, 16
    %v104 = vshll.u32 %v100, 16
    %v105 = vshrl.u32 %v100, 16
    %vm106 = vc.u32 %v98, %v102
    %v107 = vsel %vm106, 1, 0
    %v108 = vadd.s32 %v98, %v102
    %v109 = vadd.s32 %v101, %v107
    %vm110 = vc.u32 %v108, %v104
    %v111 = vsel %vm110, 1, 0
    %v112 = vadd.s32 %v108, %v104
    %v113 = vadd.s32 %v109, %v111
    %v114 = vadd.s32 %v113, %v103
    %v115 = vadd.s32 %v114, %v105
    %v116 = vmul.u32 %v71, %v62
    %v117 = vadd.s32 %v93, %v112
    %vm118 = vc.u32 %v93, %v112
    %v119 = vadd.s32 %v115, 1
    %v120 = vsel %vm118, %v119, %v115
    %v121 = vadd.s32 %v116, %v120
    %v122 = vadd.s32 %v121, 536870912
    %v123 = vshrl.u32 %v122, 30
    %v124 = vshll.u32 %v123, 30
    %v125 = vsub.s32 %v121, %v124
    %vm126 = vcmp.lt.s32.totalorder %v125, 0
    %v127 = vsub.s32 0, %v125
    %v128 = vsel %vm126, %v127, %v125
    %v129 = vclz %v128
    %v130 = vsub.s32 %v129, 2
    %vm131 = vcmp.gt.s32.totalorder 0, %v130
    %v132 = vsel %vm131, 0, %v130
    %v133 = vsub.s32 32, %v132
    %v134 = vshll.u32 %v125, %v132
    %v135 = vshrl.u32 %v117, %v133
    %v136 = vor.u32 %v134, %v135
    %v137 = vsub.s32 4294967266, %v132
    %v138 = vadd.s32 %v137, 127
    %v139 = vshll.u32 %v138, 23
    %v140 = vor.u32 4788187, %v139
    %v141 = vand.u32 2147483647, %v140
    %v143 = vcvt.s32.f32 %v136
    %v144 = vmul.f32 %v143, %v141
    %v145 = vxor.u32 %v144, 2147483648
    %v146 = vsel %vm25, %v145, %v144
    %v147 = vsub.s32 4, %v123
    %v148 = vsel %vm25, %v147, %v123
    %v149 = vsel %vm24, %v22, %v146
    %v150 = vsel %vm24, 0, %v148
    %v151 = vmul.f32 %v149, %v149
    %v152 = vmul.f32 %v151, -0.001358992
    %v153 = vadd.f32 %v152, 0.041655596
    %v154 = vmul.f32 %v151, %v153
    %v155 = vadd.f32 %v154, -0.4999988
    %v156 = vmul.f32 %v151, %v155
    %v157 = vadd.f32 1.0, %v156
    %v158 = vmul.f32 %v149, %v149
    %v159 = vmul.f32 %v158, -0.00019511016
    %v160 = vadd.f32 %v159, 0.008332121
    %v161 = vmul.f32 %v158, %v160
    %v162 = vadd.f32 %v161, -0.16666654
    %v163 = vmul.f32 %v158, %v162
    %v164 = vadd.f32 %v163, 1.0
    %v165 = vmul.f32 %v164, %v149
    %vm166 = vweird.f32 %v22
    %v167 = vadd.s32 %v150, 3
    %v168 = vand.u32 %v167, 3
    %vm169 = vcmp.lt.s32.totalorder %v168, 2
    %vm170 = vcmp.eq.s32.totalorder %v168, 0
    %v171 = vxor.u32 %v165, 2147483648
    %v172 = vsel %vm170, %v157, %v171
    %vm173 = vcmp.eq.s32.totalorder %v168, 2
    %v174 = vxor.u32 %v157, 2147483648
    %v175 = vsel %vm173, %v174, %v165
    %v176 = vsel %vm169, %v172, %v175
    %v177 = vsel %vm166, nan, %v176
    %vm178 = vcmask 261120
    %179 = vst.msk [vmem:[#allocation2] sm:$0xff] %vm178, %v177
    // Predicated region
    $region10: #{tpu_custom_call.1} parent=1 // pred_check
      _
    $region11: #{tpu_custom_call.1} parent=1 // pred_check_branch
      %181 = sbr.rel (0) target = $region13
    $region12: #{tpu_custom_call.1} parent=1 // pred_region
      %183 = vsyncadd [#allocation3], 0
      %s185 = sshll.u32 [#allocation2], 4
      %s186 = int_to_ptr.vmem [resolvable:$true] %s185
      %s187 = sshll.u32 %s2, 4
      %s188 = int_to_ptr.hbm [resolvable:$true] %s187
      %190 = dma.vmem_to_hbm [thread:$0]  %s186, 128, %s188, [#allocation3]
    $region13: #{tpu_custom_call.1} parent=1 // pred_fallthru
      _
    // Predicated region
    $region14: #{tpu_custom_call.1} parent=1 // pred_check
      _
    $region15: #{tpu_custom_call.1} parent=1 // pred_check_branch
      %192 = sbr.rel (0) target = $region17
    $region16: #{tpu_custom_call.1} parent=1 // pred_region
      %194 = dma.done [#allocation3], 128
    $region17: #{tpu_custom_call.1} parent=1 // pred_fallthru
      _
    %195 = vsyncpa [#allocation3], 1

</llo_original>
